<compile_context>
chip_gen: v6e
topology: v6e:2x2x1
jax: 0.10.0
libtpu: 0.0.40
codegen_flags: <defaults>
</compile_context>

<pallas_src>
import jax
import jax.numpy as jnp
from jax.experimental import pallas as pl
from jax.experimental.pallas import tpu as pltpu


def _se_kernel(x_ref, w1t_ref, b1_ref, w2t_ref, b2_ref, o_ref):
    # x_ref block: (TB, C, L); w*t: (C, C) pre-transposed; b*: (1, C) lane-dense.
    x = x_ref[...]                                          # (TB, C, L)

    # --- squeeze: adaptive avg pool over L, accumulate in f32 ---
    m = jnp.mean(x.astype(jnp.float32), axis=-1)            # (TB, C)

    # --- compress: 1x1 conv == batched (TB,C)x(C,C) matmul + bias, ReLU ---
    h = jnp.dot(m, w1t_ref[...], preferred_element_type=jnp.float32)
    h = jnp.maximum(h + b1_ref[...], 0.0)                   # (TB, C)

    # --- excitation: 1x1 conv + sigmoid ---
    s = jnp.dot(h, w2t_ref[...], preferred_element_type=jnp.float32)
    s = jax.nn.sigmoid(s + b2_ref[...])                     # (TB, C)

    # --- scale: broadcast gate over L ---
    o_ref[...] = x * s[:, :, None].astype(x.dtype)          # (TB, C, L)


def se_forward(x, w1, b1, w2, b2, *, batch_tile=8):
    """x: (N, C, L); w1/w2: (C, C) Conv1d(k=1) weights; b1/b2: (C,) or (C, 1)."""
    N, C, L = x.shape
    itemsize = jnp.dtype(x.dtype).itemsize

    # Lane-dense parameter layout: pre-transpose weights, flatten biases to (1, C).
    w1t = jnp.asarray(w1).reshape(C, C).T
    w2t = jnp.asarray(w2).reshape(C, C).T
    b1r = jnp.asarray(b1).reshape(1, C)
    b2r = jnp.asarray(b2).reshape(1, C)

    # Size the batch tile against a conservative VMEM budget: double-buffered
    # input + output slabs ~= 4 * TB * C * L * itemsize.  12 MiB keeps us under
    # v5e's 16 MiB scoped default and well under v7x's 64 MiB physical VMEM.
    vmem_budget = 12 * 1024 * 1024
    per_batch_bytes = C * L * itemsize
    tb_cap = max(1, vmem_budget // (4 * per_batch_bytes))
    TB = int(max(1, min(batch_tile, tb_cap, N)))

    # Pad batch to a multiple of TB (padded rows are computed on zeros and
    # sliced away; keeps every DMA full-tile).
    Np = pl.cdiv(N, TB) * TB
    x_p = x if Np == N else jnp.pad(x, ((0, Np - N), (0, 0), (0, 0)))

    cost = pl.CostEstimate(
        flops=4 * N * C * C + 2 * N * C * L,
        transcendentals=N * C,
        bytes_accessed=2 * N * C * L * itemsize + 2 * C * C * 4 + 2 * C * 4,
    )

    out = pl.pallas_call(
        _se_kernel,
        out_shape=jax.ShapeDtypeStruct((Np, C, L), x.dtype),
        grid_spec=pltpu.PrefetchScalarGridSpec(
            num_scalar_prefetch=0,
            grid=(Np // TB,),
            in_specs=[
                pl.BlockSpec((TB, C, L), lambda n: (n, 0, 0)),  # x, batch tile
                pl.BlockSpec((C, C), lambda n: (0, 0)),         # w1^T (resident)
                pl.BlockSpec((1, C), lambda n: (0, 0)),         # b1 (lane-dense)
                pl.BlockSpec((C, C), lambda n: (0, 0)),         # w2^T (resident)
                pl.BlockSpec((1, C), lambda n: (0, 0)),         # b2 (lane-dense)
            ],
            out_specs=pl.BlockSpec((TB, C, L), lambda n: (n, 0, 0)),
        ),
        compiler_params=pltpu.CompilerParams(
            dimension_semantics=("parallel",),
        ),
        cost_estimate=cost,
    )(x_p, w1t, b1r, w2t, b2r)

    return out[:N] if Np != N else out


def se_reference(x, w1, b1, w2, b2):
    # Pure-JAX reference mirroring the PyTorch forward.
    m = jnp.mean(x, axis=2, keepdims=True)                     # (N, C, 1)
    h = jnp.einsum("oc,ncl->nol", w1, m) + b1[None, :, :]      # compress (1x1 conv)
    h = jnp.maximum(h, 0.0)
    s = jnp.einsum("oc,ncl->nol", w2, h) + b2[None, :, :]      # excitation
    s = jax.nn.sigmoid(s)
    return x * s


if __name__ == "__main__":
    # Small shapes consistent with an SE block over a 1D feature map.
    # N=16 with TB=8 gives a 2-step parallel grid (exercises both TCs on v7x).
    N, C, L = 16, 8, 128  # batch, channels (Cin), sequence length

    key = jax.random.PRNGKey(0)
    kx, kw1, kb1, kw2, kb2 = jax.random.split(key, 5)

    x = jax.random.normal(kx, (N, C, L), dtype=jnp.float32)

    # Conv1d(kernel_size=1) params: weight (C, C, 1) -> (C, C), bias (C,) -> (C, 1).
    bound = 1.0 / (C ** 0.5)
    w1 = jax.random.uniform(kw1, (C, C), jnp.float32, -bound, bound)
    b1 = jax.random.uniform(kb1, (C, 1), jnp.float32, -bound, bound)
    w2 = jax.random.uniform(kw2, (C, C), jnp.float32, -bound, bound)
    b2 = jax.random.uniform(kb2, (C, 1), jnp.float32, -bound, bound)

    out = se_forward(x, w1, b1, w2, b2)
    out = jax.block_until_ready(out)

    ref = se_reference(x, w1, b1, w2, b2)
    assert out.shape == (N, C, L)
    assert jnp.allclose(out, ref, rtol=1e-4, atol=1e-5), "mismatch vs reference"

    print("KERNEL_OK")
</pallas_src>

<mosaic_0001>
module attributes {stable_mosaic.version = 11 : i64} {
  func.func @_se_kernel(%arg0: i32, %arg1: memref<8x8x128xf32, #tpu.memory_space<vmem>>, %arg2: memref<8x8xf32, #tpu.memory_space<vmem>>, %arg3: memref<1x8xf32, #tpu.memory_space<vmem>>, %arg4: memref<8x8xf32, #tpu.memory_space<vmem>>, %arg5: memref<1x8xf32, #tpu.memory_space<vmem>>, %arg6: memref<8x8x128xf32, #tpu.memory_space<vmem>>) attributes {dimension_semantics = [#tpu.dimension_semantics<parallel>], iteration_bounds = array<i64: 2>, scalar_prefetch = 0 : i64, scratch_operands = 0 : i64, tpu.core_type = #tpu.core_type<tc>, window_params = [{transform_indices = @transform_0, window_bounds = array<i64: 8, 8, 128>}, {pipeline_mode = #tpu.pipeline_mode<synchronous>, transform_indices = @transform_1, window_bounds = array<i64: 8, 8>}, {pipeline_mode = #tpu.pipeline_mode<synchronous>, transform_indices = @transform_2, window_bounds = array<i64: 1, 8>}, {pipeline_mode = #tpu.pipeline_mode<synchronous>, transform_indices = @transform_3, window_bounds = array<i64: 8, 8>}, {pipeline_mode = #tpu.pipeline_mode<synchronous>, transform_indices = @transform_4, window_bounds = array<i64: 1, 8>}, {transform_indices = @transform_5, window_bounds = array<i64: 8, 8, 128>}]} {
    %c0 = arith.constant 0 : index
    %c0_0 = arith.constant 0 : index
    %c0_1 = arith.constant 0 : index
    %0 = vector.load %arg1[%c0, %c0_0, %c0_1] : memref<8x8x128xf32, #tpu.memory_space<vmem>>, vector<8x8x128xf32>
    %cst = arith.constant dense<0.000000e+00> : vector<8x8xf32>
    %1 = vector.multi_reduction <add>, %0, %cst [2] : vector<8x8x128xf32> to vector<8x8xf32>
    %cst_2 = arith.constant 1.280000e+02 : f32
    %2 = vector.broadcast %cst_2 : f32 to vector<8x8xf32>
    %3 = arith.divf %1, %2 : vector<8x8xf32>
    %c0_3 = arith.constant 0 : index
    %c0_4 = arith.constant 0 : index
    %4 = vector.load %arg2[%c0_3, %c0_4] : memref<8x8xf32, #tpu.memory_space<vmem>>, vector<8x8xf32>
    %cst_5 = arith.constant dense<0.000000e+00> : vector<8x8xf32>
    %5 = tpu.matmul %3, %4, %cst_5 {dimension_numbers = #tpu.dot_dimension_numbers<[1], [0], [0], [1], [0, 0, 1, 1], [], []>} : vector<8x8xf32>, vector<8x8xf32>, vector<8x8xf32> -> vector<8x8xf32>
    %c0_6 = arith.constant 0 : index
    %c0_7 = arith.constant 0 : index
    %6 = vector.load %arg3[%c0_6, %c0_7] : memref<1x8xf32, #tpu.memory_space<vmem>>, vector<1x8xf32>
    %7 = vector.broadcast %6 : vector<1x8xf32> to vector<8x8xf32>
    %8 = arith.addf %5, %7 : vector<8x8xf32>
    %cst_8 = arith.constant 0.000000e+00 : f32
    %9 = vector.broadcast %cst_8 : f32 to vector<8x8xf32>
    %10 = arith.maximumf %8, %9 : vector<8x8xf32>
    %c0_9 = arith.constant 0 : index
    %c0_10 = arith.constant 0 : index
    %11 = vector.load %arg4[%c0_9, %c0_10] : memref<8x8xf32, #tpu.memory_space<vmem>>, vector<8x8xf32>
    %cst_11 = arith.constant dense<0.000000e+00> : vector<8x8xf32>
    %12 = tpu.matmul %10, %11, %cst_11 {dimension_numbers = #tpu.dot_dimension_numbers<[1], [0], [0], [1], [0, 0, 1, 1], [], []>} : vector<8x8xf32>, vector<8x8xf32>, vector<8x8xf32> -> vector<8x8xf32>
    %c0_12 = arith.constant 0 : index
    %c0_13 = arith.constant 0 : index
    %13 = vector.load %arg5[%c0_12, %c0_13] : memref<1x8xf32, #tpu.memory_space<vmem>>, vector<1x8xf32>
    %14 = vector.broadcast %13 : vector<1x8xf32> to vector<8x8xf32>
    %15 = arith.addf %12, %14 : vector<8x8xf32>
    %16 = arith.negf %15 : vector<8x8xf32>
    %17 = math.exp %16 : vector<8x8xf32>
    %cst_14 = arith.constant 1.000000e+00 : f32
    %18 = vector.broadcast %cst_14 : f32 to vector<8x8xf32>
    %19 = arith.addf %18, %17 : vector<8x8xf32>
    %20 = arith.divf %18, %19 : vector<8x8xf32>
    %21 = vector.shape_cast %20 : vector<8x8xf32> to vector<8x8x1xf32>
    %22 = vector.broadcast %21 : vector<8x8x1xf32> to vector<8x8x128xf32>
    %23 = arith.mulf %0, %22 : vector<8x8x128xf32>
    %c0_15 = arith.constant 0 : index
    %c0_16 = arith.constant 0 : index
    %c0_17 = arith.constant 0 : index
    %24 = vector.load %arg6[%c0_15, %c0_16, %c0_17] : memref<8x8x128xf32, #tpu.memory_space<vmem>>, vector<8x8x128xf32>
    tpu.vector_store %arg6[%c0_15, %c0_16, %c0_17], %23 {strides = array<i32>} : memref<8x8x128xf32, #tpu.memory_space<vmem>>, vector<8x8x128xf32>,
    return
  }
  func.func @transform_0(%arg0: i32) -> (i32, i32, i32) {
    %c0_i32 = arith.constant 0 : i32
    %c0_i32_0 = arith.constant 0 : i32
    %c0_i32_1 = arith.constant 0 : i32
    return %arg0, %c0_i32, %c0_i32_0 : i32, i32, i32
  }
  func.func @transform_1(%arg0: i32) -> (i32, i32) {
    %c0_i32 = arith.constant 0 : i32
    %c0_i32_0 = arith.constant 0 : i32
    %c0_i32_1 = arith.constant 0 : i32
    return %c0_i32, %c0_i32_0 : i32, i32
  }
  func.func @transform_2(%arg0: i32) -> (i32, i32) {
    %c0_i32 = arith.constant 0 : i32
    %c0_i32_0 = arith.constant 0 : i32
    %c0_i32_1 = arith.constant 0 : i32
    return %c0_i32, %c0_i32_0 : i32, i32
  }
  func.func @transform_3(%arg0: i32) -> (i32, i32) {
    %c0_i32 = arith.constant 0 : i32
    %c0_i32_0 = arith.constant 0 : i32
    %c0_i32_1 = arith.constant 0 : i32
    return %c0_i32, %c0_i32_0 : i32, i32
  }
  func.func @transform_4(%arg0: i32) -> (i32, i32) {
    %c0_i32 = arith.constant 0 : i32
    %c0_i32_0 = arith.constant 0 : i32
    %c0_i32_1 = arith.constant 0 : i32
    return %c0_i32, %c0_i32_0 : i32, i32
  }
  func.func @transform_5(%arg0: i32) -> (i32, i32, i32) {
    %c0_i32 = arith.constant 0 : i32
    %c0_i32_0 = arith.constant 0 : i32
    %c0_i32_1 = arith.constant 0 : i32
    return %arg0, %c0_i32, %c0_i32_0 : i32, i32, i32
  }
}

</mosaic_0001>

<llo_original>
// kernel: tpu_custom_call.1
$region0: #{tpu_custom_call.1}
  #allocation0 [shape = 'u32[]', space=smem, size = 0x4, offset = 0x4, fixed_abs, tag = 'smem constant byte address 0x4 - core index']
  #allocation1 [shape = 'u32[144,128]{1,0:T(1,128)}', space=vmem, size = 0x12000, scoped, tag = 'internal scratch']
  %s0 = inlined_call_operand.hbm [shape: f32[16,8,128], index: 0, kind: input, shape index: {}]
  %s1 = inlined_call_operand.hbm [shape: f32[8,8], index: 1, kind: input, shape index: {}]
  %s2 = inlined_call_operand.vmem [shape: f32[1,8], index: 2, kind: input, shape index: {}]
  %s3 = inlined_call_operand.hbm [shape: f32[8,8], index: 3, kind: input, shape index: {}]
  %s4 = inlined_call_operand.vmem [shape: f32[1,8], index: 4, kind: input, shape index: {}]
  %s5 = inlined_call_operand.hbm [shape: f32[16,8,128], index: 5, kind: output, shape index: {}]
  %s6 = sld [smem:[#allocation0]]
  $region65: #{tpu_custom_call.1} parent=0
    _
  %s8 = ssub.s32 1, %s6
  %s9 = scalar_select 0, %s8, %s6
  $region1: #{tpu_custom_call.1} parent=0
    #allocation2 [shape = 'u8[65536]{0}', space=vmem, size = 0x10000, scoped, tag = 'input window, operand 0']
    #allocation3 [shape = 's32[2]{0}', space=sflag, size = 0x8, scoped, tag = 'scoped memory for tpu_custom_call.1']
    #allocation4 [shape = 's32[2]{0}', space=sflag, size = 0x8, scoped, tag = 'scoped memory for tpu_custom_call.1']
    #allocation5 [shape = 'u8[4096]{0}', space=vmem, size = 0x1000, scoped, tag = 'input window, operand 1, single buffered']
    #allocation6 [shape = 's32[1]{0}', space=sflag, size = 0x4, scoped, tag = 'scoped memory for tpu_custom_call.1']
    #allocation7 [shape = 'u8[4096]{0}', space=vmem, size = 0x1000, scoped, tag = 'input window, operand 3, single buffered']
    #allocation8 [shape = 'u8[65536]{0}', space=vmem, size = 0x10000, scoped, tag = 'output window, operand 0']
    %10 = vsyncpa [#allocation3], 0
    %s11 = scalar_lea.sflag [#allocation3], 1
    %12 = vsyncpa %s11, 0
    %13 = vsyncpa [#allocation6], 0
    %14 = vsyncpa [#allocation4], 0
    %s15 = scalar_lea.sflag [#allocation4], 1
    %16 = vsyncpa %s15, 0
    loop: start=0, step=1, limit=4
    $region2: #{tpu_custom_call.1} parent=1 // loop_pre_header
      _
    $region3: #{tpu_custom_call.1} parent=1 // loop_header
      %s18 = sphi 0, %s22
      %p19 = scmp.ge.s32.totalorder %s18, 4
      %s28 = sphi 0, %s30
      %s31 = sphi 0, %s28
      %s32 = sphi 0, %s31
      %s48 = sphi 0, %s32
      %s52 = sphi 0, %s52
      %s54 = sphi 0, %s52
      %s55 = sphi 0, %s54
      %s69 = sphi 0, %s55
      %s73 = sphi 0, %s73
      %s75 = sphi 0, %s73
      %s76 = sphi 0, %s75
      %s90 = sphi 0, %s76
      %s94 = sphi 0, %s94
      %s96 = sphi 0, %s94
      %s97 = sphi 0, %s96
      %s111 = sphi 0, %s97
      %s115 = sphi 0, %s115
      %s117 = sphi 0, %s115
      %s118 = sphi 0, %s117
      %s132 = sphi 0, %s118
      %s138 = sphi 0, %s140
      %s141 = sphi 0, %s138
      %s142 = sphi 0, %s141
      %s158 = sphi 0, %s142
    $region4: #{tpu_custom_call.1} parent=1 // loop_header_branch
      %21 = sbr.rel (%p19) target = $region8
    $region5: #{tpu_custom_call.1} parent=1 // loop_body
      %s23 = ssub.s32 %s18, 1
      %s24 = ssub.s32 %s18, 2
      %s25 = sadd.s32 %s18, 1
      %s26 = ssub.s32 %s18, %s25
      %p27 = scmp.eq.s32.totalorder %s26, 0
      %s29 = sadd.s32 %s28, 1
      %s30 = scalar_select %p27, %s28, %s29
      %p33 = pneg %p27
      %p34 = scmp.eq.s32.totalorder %s18, 1
      %p35 = por %p33, %p34
      %p36 = scmp.ne.s32.totalorder %s28, %s31
      %p37 = scmp.eq.s32.totalorder %s18, 0
      %p38 = por %p36, %p37
      %p39 = scmp.ne.s32.totalorder %s28, %s31
      %p40 = scmp.eq.s32.totalorder %s23, 1
      %p41 = por %p39, %p40
      %p42 = scmp.ne.s32.totalorder %s31, %s32
      %p43 = scmp.eq.s32.totalorder %s23, 0
      %p44 = por %p42, %p43
      %p45 = scmp.ne.s32.totalorder %s31, %s32
      %p46 = scmp.eq.s32.totalorder %s24, 1
      %p47 = por %p45, %p46
      %p49 = scmp.ne.s32.totalorder %s32, %s48
      %p50 = scmp.eq.s32.totalorder %s24, 0
      %p51 = por %p49, %p50
      %s53 = sadd.s32 %s52, 1
      %p56 = scmp.eq.s32.totalorder %s18, 1
      %p57 = scmp.ne.s32.totalorder %s52, %s54
      %p58 = scmp.eq.s32.totalorder %s18, 0
      %p59 = por %p57, %p58
      %p60 = scmp.ne.s32.totalorder %s52, %s54
      %p61 = scmp.eq.s32.totalorder %s23, 1
      %p62 = por %p60, %p61
      %p63 = scmp.ne.s32.totalorder %s54, %s55
      %p64 = scmp.eq.s32.totalorder %s23, 0
      %p65 = por %p63, %p64
      %p66 = scmp.ne.s32.totalorder %s54, %s55
      %p67 = scmp.eq.s32.totalorder %s24, 1
      %p68 = por %p66, %p67
      %p70 = scmp.ne.s32.totalorder %s55, %s69
      %p71 = scmp.eq.s32.totalorder %s24, 0
      %p72 = por %p70, %p71
      %s74 = sadd.s32 %s73, 1
      %p77 = scmp.eq.s32.totalorder %s18, 1
      %p78 = scmp.ne.s32.totalorder %s73, %s75
      %p79 = scmp.eq.s32.totalorder %s18, 0
      %p80 = por %p78, %p79
      %p81 = scmp.ne.s32.totalorder %s73, %s75
      %p82 = scmp.eq.s32.totalorder %s23, 1
      %p83 = por %p81, %p82
      %p84 = scmp.ne.s32.totalorder %s75, %s76
      %p85 = scmp.eq.s32.totalorder %s23, 0
      %p86 = por %p84, %p85
      %p87 = scmp.ne.s32.totalorder %s75, %s76
      %p88 = scmp.eq.s32.totalorder %s24, 1
      %p89 = por %p87, %p88
      %p91 = scmp.ne.s32.totalorder %s76, %s90
      %p92 = scmp.eq.s32.totalorder %s24, 0
      %p93 = por %p91, %p92
      %s95 = sadd.s32 %s94, 1
      %p98 = scmp.eq.s32.totalorder %s18, 1
      %p99 = scmp.ne.s32.totalorder %s94, %s96
      %p100 = scmp.eq.s32.totalorder %s18, 0
      %p101 = por %p99, %p100
      %p102 = scmp.ne.s32.totalorder %s94, %s96
      %p103 = scmp.eq.s32.totalorder %s23, 1
      %p104 = por %p102, %p103
      %p105 = scmp.ne.s32.totalorder %s96, %s97
      %p106 = scmp.eq.s32.totalorder %s23, 0
      %p107 = por %p105, %p106
      %p108 = scmp.ne.s32.totalorder %s96, %s97
      %p109 = scmp.eq.s32.totalorder %s24, 1
      %p110 = por %p108, %p109
      %p112 = scmp.ne.s32.totalorder %s97, %s111
      %p113 = scmp.eq.s32.totalorder %s24, 0
      %p114 = por %p112, %p113
      %s116 = sadd.s32 %s115, 1
      %p119 = scmp.eq.s32.totalorder %s18, 1
      %p120 = scmp.ne.s32.totalorder %s115, %s117
      %p121 = scmp.eq.s32.totalorder %s18, 0
      %p122 = por %p120, %p121
      %p123 = scmp.ne.s32.totalorder %s115, %s117
      %p124 = scmp.eq.s32.totalorder %s23, 1
      %p125 = por %p123, %p124
      %p126 = scmp.ne.s32.totalorder %s117, %s118
      %p127 = scmp.eq.s32.totalorder %s23, 0
      %p128 = por %p126, %p127
      %p129 = scmp.ne.s32.totalorder %s117, %s118
      %p130 = scmp.eq.s32.totalorder %s24, 1
      %p131 = por %p129, %p130
      %p133 = scmp.ne.s32.totalorder %s118, %s132
      %p134 = scmp.eq.s32.totalorder %s24, 0
      %p135 = por %p133, %p134
      %s136 = ssub.s32 %s18, %s25
      %p137 = scmp.eq.s32.totalorder %s136, 0
      %s139 = sadd.s32 %s138, 1
      %s140 = scalar_select %p137, %s138, %s139
      %p143 = pneg %p137
      %p144 = scmp.eq.s32.totalorder %s18, 1
      %p145 = por %p143, %p144
      %p146 = scmp.ne.s32.totalorder %s138, %s141
      %p147 = scmp.eq.s32.totalorder %s18, 0
      %p148 = por %p146, %p147
      %p149 = scmp.ne.s32.totalorder %s138, %s141
      %p150 = scmp.eq.s32.totalorder %s23, 1
      %p151 = por %p149, %p150
      %p152 = scmp.ne.s32.totalorder %s141, %s142
      %p153 = scmp.eq.s32.totalorder %s23, 0
      %p154 = por %p152, %p153
      %p155 = scmp.ne.s32.totalorder %s141, %s142
      %p156 = scmp.eq.s32.totalorder %s24, 1
      %p157 = por %p155, %p156
      %p159 = scmp.ne.s32.totalorder %s142, %s158
      %p160 = scmp.eq.s32.totalorder %s24, 0
      %p161 = por %p159, %p160
      %p162 = scmp.le.s32.totalorder 1, %s18
      %p163 = scmp.lt.s32.totalorder %s18, 3
      %p164 = pnand %p162, %p163
      %p165 = pneg %p164
      // Predicated region
      $region9: #{tpu_custom_call.1} parent=5 // pred_check
        _
      $region10: #{tpu_custom_call.1} parent=5 // pred_check_branch
        %167 = sbr.rel (%p164) target = $region12
      $region11: #{tpu_custom_call.1} parent=5 // pred_region
        %s168 = ssub.s32 %s18, 1
        // Predicated region
        $region13: #{tpu_custom_call.1} parent=11 // pred_check
          %p169 = pneg %p65
        $region14: #{tpu_custom_call.1} parent=11 // pred_check_branch
          %171 = sbr.rel (%p169) target = $region16
        $region15: #{tpu_custom_call.1} parent=11 // pred_region
          %s173 = ssub.s32 128, 128
          %174 = vsyncadd [#allocation6], %s173
          %s176 = sshll.u32 [#allocation5], 4
          %s177 = int_to_ptr.vmem [resolvable:$true] %s176
          %179 = dma.hbm_to_vmem [thread:$0]  %s1, 128, %s177, [#allocation6]
        $region16: #{tpu_custom_call.1} parent=11 // pred_fallthru
          _
        // Predicated region
        $region17: #{tpu_custom_call.1} parent=11 // pred_check
          %p180 = pneg %p86
        $region18: #{tpu_custom_call.1} parent=11 // pred_check_branch
          %182 = sbr.rel (%p180) target = $region20
        $region19: #{tpu_custom_call.1} parent=11 // pred_region
          _
        $region20: #{tpu_custom_call.1} parent=11 // pred_fallthru
          _
        // Predicated region
        $region21: #{tpu_custom_call.1} parent=11 // pred_check
          %p183 = pneg %p107
        $region22: #{tpu_custom_call.1} parent=11 // pred_check_branch
          %185 = sbr.rel (%p183) target = $region24
        $region23: #{tpu_custom_call.1} parent=11 // pred_region
          %s187 = ssub.s32 128, 128
          %188 = vsyncadd [#allocation6], %s187
          %s190 = sshll.u32 [#allocation7], 4
          %s191 = int_to_ptr.vmem [resolvable:$true] %s190
          %193 = dma.hbm_to_vmem [thread:$0]  %s3, 128, %s191, [#allocation6]
        $region24: #{tpu_custom_call.1} parent=11 // pred_fallthru
          _
        // Predicated region
        $region25: #{tpu_custom_call.1} parent=11 // pred_check
          %p194 = pneg %p128
        $region26: #{tpu_custom_call.1} parent=11 // pred_check_branch
          %196 = sbr.rel (%p194) target = $region28
        $region27: #{tpu_custom_call.1} parent=11 // pred_region
          _
        $region28: #{tpu_custom_call.1} parent=11 // pred_fallthru
          _
      $region12: #{tpu_custom_call.1} parent=5 // pred_fallthru
        _
      %p197 = scmp.lt.s32.totalorder %s18, 2
      // Predicated region
      $region29: #{tpu_custom_call.1} parent=5 // pred_check
        %p198 = pneg %p197
      $region30: #{tpu_custom_call.1} parent=5 // pred_check_branch
        %200 = sbr.rel (%p198) target = $region32
      $region31: #{tpu_custom_call.1} parent=5 // pred_region
        // Predicated region
        $region33: #{tpu_custom_call.1} parent=31 // pred_check
          %p201 = pneg %p38
        $region34: #{tpu_custom_call.1} parent=31 // pred_check_branch
          %203 = sbr.rel (%p201) target = $region36
        $region35: #{tpu_custom_call.1} parent=31 // pred_region
          %s204 = sand.u32 %s28, 1
          %s205 = scalar_lea.sflag [#allocation3], %s204
          %s206 = sand.u32 %s28, 1
          %s207 = smul.addr %s206, 64
          %s208 = scalar_lea.vmem [#allocation2], %s207
          %s209 = smul.u32 8, %s18
          %s211 = ssub.s32 1024, 1024
          %212 = vsyncadd %s205, %s211
          %s213 = smul.addr %s209, 128
          %s214 = scalar_lea.hbm %s0, %s213
          %s215 = sshll.u32 %s208, 4
          %s216 = int_to_ptr.vmem [resolvable:$true] %s215
          %221 = dma.hbm_to_vmem [thread:$0]  %s214, 1024, %s216, %s205, 128, 128, 8
        $region36: #{tpu_custom_call.1} parent=31 // pred_fallthru
          _
      $region32: #{tpu_custom_call.1} parent=5 // pred_fallthru
        _
      %p222 = scmp.le.s32.totalorder 1, %s18
      %p223 = scmp.lt.s32.totalorder %s18, 3
      %p224 = pnand %p222, %p223
      %p225 = pneg %p224
      // Predicated region
      $region37: #{tpu_custom_call.1} parent=5 // pred_check
        _
      $region38: #{tpu_custom_call.1} parent=5 // pred_check_branch
        %227 = sbr.rel (%p224) target = $region40
      $region39: #{tpu_custom_call.1} parent=5 // pred_region
        %s228 = ssub.s32 %s18, 1
        %s229 = sand.u32 %s31, 1
        %s230 = scalar_lea.sflag [#allocation3], %s229
        %s231 = sand.u32 %s31, 1
        %s232 = smul.addr %s231, 64
        %s233 = scalar_lea.vmem [#allocation2], %s232
        // Predicated region
        $region41: #{tpu_custom_call.1} parent=39 // pred_check
          %p234 = pneg %p44
        $region42: #{tpu_custom_call.1} parent=39 // pred_check_branch
          %236 = sbr.rel (%p234) target = $region44
        $region43: #{tpu_custom_call.1} parent=39 // pred_region
          %237 = dma.done %s230, 1024
        $region44: #{tpu_custom_call.1} parent=39 // pred_fallthru
          _
        // Predicated region
        $region45: #{tpu_custom_call.1} parent=39 // pred_check
          %p238 = pneg %p65
        $region46: #{tpu_custom_call.1} parent=39 // pred_check_branch
          %240 = sbr.rel (%p238) target = $region48
        $region47: #{tpu_custom_call.1} parent=39 // pred_region
          %241 = dma.done [#allocation6], 128
        $region48: #{tpu_custom_call.1} parent=39 // pred_fallthru
          _
        // Predicated region
        $region49: #{tpu_custom_call.1} parent=39 // pred_check
          %p242 = pneg %p107
        $region50: #{tpu_custom_call.1} parent=39 // pred_check_branch
          %244 = sbr.rel (%p242) target = $region52
        $region51: #{tpu_custom_call.1} parent=39 // pred_region
          %245 = dma.done [#allocation6], 128
        $region52: #{tpu_custom_call.1} parent=39 // pred_fallthru
          _
        %s246 = sand.u32 %s31, 1
        %s247 = scalar_lea.sflag [#allocation3], %s246
        %s248 = sand.u32 %s31, 1
        %s249 = smul.addr %s248, 64
        %s250 = scalar_lea.vmem [#allocation2], %s249
        %p251 = pneg %p44
        %p252 = pneg %p41
        %p253 = pneg %p65
        %p254 = pneg %p62
        %p255 = pneg %p86
        %p256 = pneg %p83
        %p257 = pneg %p107
        %p258 = pneg %p104
        %p259 = pneg %p128
        %p260 = pneg %p125
        %p261 = pneg %p154
        %p262 = pneg %p151
        %s263 = sand.u32 %s141, 1
        %s264 = scalar_lea.sflag [#allocation4], %s263
        %s265 = sand.u32 %s141, 1
        %s266 = smul.addr %s265, 64
        %s267 = scalar_lea.vmem [#allocation8], %s266
        %s268 = smul.u32 8, %s23
        %s269 = smul.u32 8, %s23
        %v270 = vld [vmem:[%s233] sm:$0xff]
        %v271 = vld [vmem:[%s233 + $0x8] sm:$0xff]
        %v272 = vld [vmem:[%s233 + $0x10] sm:$0xff]
        %v273 = vld [vmem:[%s233 + $0x18] sm:$0xff]
        %v274 = vld [vmem:[%s233 + $0x20] sm:$0xff]
        %v275 = vld [vmem:[%s233 + $0x28] sm:$0xff]
        %v276 = vld [vmem:[%s233 + $0x30] sm:$0xff]
        %v277 = vld [vmem:[%s233 + $0x38] sm:$0xff]
        %278 = vadd.xlane.f32.xlu0 %v270
        %v279 = vpop.xlane.xlu0 %278
        %280 = vadd.xlane.f32.xlu0 %v271
        %v281 = vpop.xlane.xlu0 %280
        %282 = vadd.xlane.f32.xlu0 %v272
        %v283 = vpop.xlane.xlu0 %282
        %284 = vadd.xlane.f32.xlu0 %v273
        %v285 = vpop.xlane.xlu0 %284
        %286 = vadd.xlane.f32.xlu0 %v274
        %v287 = vpop.xlane.xlu0 %286
        %288 = vadd.xlane.f32.xlu0 %v275
        %v289 = vpop.xlane.xlu0 %288
        %290 = vadd.xlane.f32.xlu0 %v276
        %v291 = vpop.xlane.xlu0 %290
        %292 = vadd.xlane.f32.xlu0 %v277
        %v293 = vpop.xlane.xlu0 %292
        %v294 = vrcp.pop 128.0
        %v295 = vmul.f32 %v279, %v294
        %v296 = vmul.f32 %v281, %v294
        %v297 = vmul.f32 %v283, %v294
        %v298 = vmul.f32 %v285, %v294
        %v299 = vmul.f32 %v287, %v294
        %v300 = vmul.f32 %v289, %v294
        %v301 = vmul.f32 %v291, %v294
        %v302 = vmul.f32 %v293, %v294
        %v303 = vld [vmem:[#allocation5] sm:$0xff]
        %v304 = vld [vmem:[%s2] sm:$0x1]
        %v306 = vlaneseq
        %v307 = vshrl.u32 %v306, 7
        %v308 = vsub.s32 0, %v307
        %v309 = vrot.slane %v304, %v308
        %v319 = vlaneseq
        %v320 = vand.u32 %v319, 127
        %v321 = vlaneseq
        %v322 = vshrl.u32 %v321, 7
        %v323 = vsub.s32 %v320, %v322
        %v324 = vrot.slane %v295, %v323
        %v325 = vlaneseq
        %v326 = vshrl.u32 %v325, 7
        %v327 = vsub.s32 %v320, %v326
        %v328 = vrot.slane %v296, %v327
        %v329 = vlaneseq
        %v330 = vshrl.u32 %v329, 7
        %v331 = vsub.s32 %v320, %v330
        %v332 = vrot.slane %v297, %v331
        %v333 = vlaneseq
        %v334 = vshrl.u32 %v333, 7
        %v335 = vsub.s32 %v320, %v334
        %v336 = vrot.slane %v298, %v335
        %v337 = vlaneseq
        %v338 = vshrl.u32 %v337, 7
        %v339 = vsub.s32 %v320, %v338
        %v340 = vrot.slane %v299, %v339
        %v341 = vlaneseq
        %v342 = vshrl.u32 %v341, 7
        %v343 = vsub.s32 %v320, %v342
        %v344 = vrot.slane %v300, %v343
        %v345 = vlaneseq
        %v346 = vshrl.u32 %v345, 7
        %v347 = vsub.s32 %v320, %v346
        %v348 = vrot.slane %v301, %v347
        %v349 = vlaneseq
        %v350 = vshrl.u32 %v349, 7
        %v351 = vsub.s32 %v320, %v350
        %v352 = vrot.slane %v302, %v351
        %vm353 = vcmask 1041409
        %v354 = vsel %vm353, %v328, %v324
        %vm355 = vcmask 1042434
        %v356 = vsel %vm355, %v332, %v354
        %vm357 = vcmask 1043459
        %v358 = vsel %vm357, %v336, %v356
        %vm359 = vcmask 1044484
        %v360 = vsel %vm359, %v340, %v358
        %vm361 = vcmask 1045509
        %v362 = vsel %vm361, %v344, %v360
        %vm363 = vcmask 1046534
        %v364 = vsel %vm363, %v348, %v362
        %vm365 = vcmask 1047559
        %v366 = vsel %vm365, %v352, %v364
        %vm367 = vcmask 64512
        %v368 = vsel %vm367, %v366, 0
        %370 = vmatprep.subr.mxu0 0.0
        %371 = vmatpush1.msra.mxu0 0.0
        %372 = vmatprep.subr.mxu0 0.0
        %373 = vmatpush1.msra.mxu0 0.0
        %374 = vmatprep.subr.mxu0 0.0
        %375 = vmatpush1.msra.mxu0 0.0
        %376 = vmatprep.subr.mxu0 0.0
        %377 = vmatpush1.msra.mxu0 0.0
        %378 = vmatprep.subr.mxu0 0.0
        %379 = vmatpush1.msra.mxu0 0.0
        %380 = vmatprep.subr.mxu0 0.0
        %381 = vmatpush1.msra.mxu0 0.0
        %382 = vmatprep.subr.mxu0 0.0
        %383 = vmatpush1.msra.mxu0 0.0
        %384 = vmatprep.subr.mxu0 0.0
        %385 = vmatpush1.msra.mxu0 0.0
        %386 = vmatprep.subr.mxu0 0.0
        %387 = vmatpush1.msra.mxu0 0.0
        %388 = vmatprep.subr.mxu0 0.0
        %389 = vmatpush1.msra.mxu0 0.0
        %390 = vmatprep.subr.mxu0 0.0
        %391 = vmatpush1.msra.mxu0 0.0
        %392 = vmatprep.subr.mxu0 0.0
        %393 = vmatpush1.msra.mxu0 0.0
        %394 = vmatprep.subr.mxu0 0.0
        %395 = vmatpush1.msra.mxu0 0.0
        %396 = vmatprep.subr.mxu0 0.0
        %397 = vmatpush1.msra.mxu0 0.0
        %398 = vmatprep.subr.mxu0 0.0
        %399 = vmatpush1.msra.mxu0 0.0
        %400 = vmatprep.subr.mxu0 0.0
        %401 = vmatpush1.msra.mxu0 %v303
        %402 = vmatprep.subr.mxu0 0.0
        %403 = vmatpush2.msra.mxu0 0.0
        %404 = vmatprep.subr.mxu0 0.0
        %405 = vmatpush2.msra.mxu0 0.0
        %406 = vmatprep.subr.mxu0 0.0
        %407 = vmatpush2.msra.mxu0 0.0
        %408 = vmatprep.subr.mxu0 0.0
        %409 = vmatpush2.msra.mxu0 0.0
        %410 = vmatprep.subr.mxu0 0.0
        %411 = vmatpush2.msra.mxu0 0.0
        %412 = vmatprep.subr.mxu0 0.0
        %413 = vmatpush2.msra.mxu0 0.0
        %414 = vmatprep.subr.mxu0 0.0
        %415 = vmatpush2.msra.mxu0 0.0
        %416 = vmatprep.subr.mxu0 0.0
        %417 = vmatpush2.msra.mxu0 0.0
        %418 = vmatprep.subr.mxu0 0.0
        %419 = vmatpush2.msra.mxu0 0.0
        %420 = vmatprep.subr.mxu0 0.0
        %421 = vmatpush2.msra.mxu0 0.0
        %422 = vmatprep.subr.mxu0 0.0
        %423 = vmatpush2.msra.mxu0 0.0
        %424 = vmatprep.subr.mxu0 0.0
        %425 = vmatpush2.msra.mxu0 0.0
        %426 = vmatprep.subr.mxu0 0.0
        %427 = vmatpush2.msra.mxu0 0.0
        %428 = vmatprep.subr.mxu0 0.0
        %429 = vmatpush2.msra.mxu0 0.0
        %430 = vmatprep.subr.mxu0 0.0
        %431 = vmatpush2.msra.mxu0 0.0
        %432 = vmatprep.subr.mxu0 0.0
        %433 = vmatpush2.msra.mxu0 0.0
        %434 = vmatprep.mubr.f32.mxu0 0.0
        %435 = vmatmul.mubr.f32.gmra.mxu0 %v368
        %v436 = vpop.f32.mrf.mxu0
        %v437 = vadd.f32 %v309, %v436
        %v438 = vpop.f32.mrf.mxu0
        %439 = vdwg.mxu0
        %v440 = vmax.f32 %v437, 0.0
        %v441 = vld [vmem:[#allocation7] sm:$0xff]
        %v442 = vld [vmem:[%s4] sm:$0x1]
        %v444 = vlaneseq
        %v445 = vshrl.u32 %v444, 7
        %v446 = vsub.s32 0, %v445
        %v447 = vrot.slane %v442, %v446
        %v450 = vsel %vm367, %v440, 0
        %452 = vmatprep.subr.mxu0 0.0
        %453 = vmatpush1.msra.mxu0 0.0
        %454 = vmatprep.subr.mxu0 0.0
        %455 = vmatpush1.msra.mxu0 0.0
        %456 = vmatprep.subr.mxu0 0.0
        %457 = vmatpush1.msra.mxu0 0.0
        %458 = vmatprep.subr.mxu0 0.0
        %459 = vmatpush1.msra.mxu0 0.0
        %460 = vmatprep.subr.mxu0 0.0
        %461 = vmatpush1.msra.mxu0 0.0
        %462 = vmatprep.subr.mxu0 0.0
        %463 = vmatpush1.msra.mxu0 0.0
        %464 = vmatprep.subr.mxu0 0.0
        %465 = vmatpush1.msra.mxu0 0.0
        %466 = vmatprep.subr.mxu0 0.0
        %467 = vmatpush1.msra.mxu0 0.0
        %468 = vmatprep.subr.mxu0 0.0
        %469 = vmatpush1.msra.mxu0 0.0
        %470 = vmatprep.subr.mxu0 0.0
        %471 = vmatpush1.msra.mxu0 0.0
        %472 = vmatprep.subr.mxu0 0.0
        %473 = vmatpush1.msra.mxu0 0.0
        %474 = vmatprep.subr.mxu0 0.0
        %475 = vmatpush1.msra.mxu0 0.0
        %476 = vmatprep.subr.mxu0 0.0
        %477 = vmatpush1.msra.mxu0 0.0
        %478 = vmatprep.subr.mxu0 0.0
        %479 = vmatpush1.msra.mxu0 0.0
        %480 = vmatprep.subr.mxu0 0.0
        %481 = vmatpush1.msra.mxu0 0.0
        %482 = vmatprep.subr.mxu0 0.0
        %483 = vmatpush1.msra.mxu0 %v441
        %484 = vmatprep.subr.mxu0 0.0
        %485 = vmatpush2.msra.mxu0 0.0
        %486 = vmatprep.subr.mxu0 0.0
        %487 = vmatpush2.msra.mxu0 0.0
        %488 = vmatprep.subr.mxu0 0.0
        %489 = vmatpush2.msra.mxu0 0.0
        %490 = vmatprep.subr.mxu0 0.0
        %491 = vmatpush2.msra.mxu0 0.0
        %492 = vmatprep.subr.mxu0 0.0
        %493 = vmatpush2.msra.mxu0 0.0
        %494 = vmatprep.subr.mxu0 0.0
        %495 = vmatpush2.msra.mxu0 0.0
        %496 = vmatprep.subr.mxu0 0.0
        %497 = vmatpush2.msra.mxu0 0.0
        %498 = vmatprep.subr.mxu0 0.0
        %499 = vmatpush2.msra.mxu0 0.0
        %500 = vmatprep.subr.mxu0 0.0
        %501 = vmatpush2.msra.mxu0 0.0
        %502 = vmatprep.subr.mxu0 0.0
        %503 = vmatpush2.msra.mxu0 0.0
        %504 = vmatprep.subr.mxu0 0.0
        %505 = vmatpush2.msra.mxu0 0.0
        %506 = vmatprep.subr.mxu0 0.0
        %507 = vmatpush2.msra.mxu0 0.0
        %508 = vmatprep.subr.mxu0 0.0
        %509 = vmatpush2.msra.mxu0 0.0
        %510 = vmatprep.subr.mxu0 0.0
        %511 = vmatpush2.msra.mxu0 0.0
        %512 = vmatprep.subr.mxu0 0.0
        %513 = vmatpush2.msra.mxu0 0.0
        %514 = vmatprep.subr.mxu0 0.0
        %515 = vmatpush2.msra.mxu0 0.0
        %516 = vmatprep.mubr.f32.mxu0 0.0
        %517 = vmatmul.mubr.f32.gmra.mxu0 %v450
        %v518 = vpop.f32.mrf.mxu0
        %v519 = vadd.f32 %v447, %v518
        %v520 = vpop.f32.mrf.mxu0
        %521 = vdwg.mxu0
        %v522 = vxor.u32 %v519, 2147483648
        %v523 = vmul.f32 %v522, 1.442695
        %v524 = vpow.pop %v523
        %v525 = vadd.f32 %v524, 1.0
        %v526 = vrcp.pop %v525
        %v527 = vmul.f32 1.0, %v526
        %v528 = vlaneseq
        %v529 = vshrl.u32 %v528, 7
        %v530 = vsub.s32 0, %v529
        %v531 = vrot.slane %v527, %v530
        %533 = vbcast.lane.b32.xlu0 %v531, 256
        %v534 = vpop.permute.xlu0 %533
        %v535 = vlaneseq
        %v536 = vshrl.u32 %v535, 7
        %v537 = vsub.s32 1, %v536
        %v538 = vrot.slane %v527, %v537
        %540 = vbcast.lane.b32.xlu0 %v538, 256
        %v541 = vpop.permute.xlu0 %540
        %v542 = vlaneseq
        %v543 = vshrl.u32 %v542, 7
        %v544 = vsub.s32 2, %v543
        %v545 = vrot.slane %v527, %v544
        %547 = vbcast.lane.b32.xlu0 %v545, 256
        %v548 = vpop.permute.xlu0 %547
        %v549 = vlaneseq
        %v550 = vshrl.u32 %v549, 7
        %v551 = vsub.s32 3, %v550
        %v552 = vrot.slane %v527, %v551
        %554 = vbcast.lane.b32.xlu0 %v552, 256
        %v555 = vpop.permute.xlu0 %554
        %v556 = vlaneseq
        %v557 = vshrl.u32 %v556, 7
        %v558 = vsub.s32 4, %v557
        %v559 = vrot.slane %v527, %v558
        %561 = vbcast.lane.b32.xlu0 %v559, 256
        %v562 = vpop.permute.xlu0 %561
        %v563 = vlaneseq
        %v564 = vshrl.u32 %v563, 7
        %v565 = vsub.s32 5, %v564
        %v566 = vrot.slane %v527, %v565
        %568 = vbcast.lane.b32.xlu0 %v566, 256
        %v569 = vpop.permute.xlu0 %568
        %v570 = vlaneseq
        %v571 = vshrl.u32 %v570, 7
        %v572 = vsub.s32 6, %v571
        %v573 = vrot.slane %v527, %v572
        %575 = vbcast.lane.b32.xlu0 %v573, 256
        %v576 = vpop.permute.xlu0 %575
        %v577 = vlaneseq
        %v578 = vshrl.u32 %v577, 7
        %v579 = vsub.s32 7, %v578
        %v580 = vrot.slane %v527, %v579
        %582 = vbcast.lane.b32.xlu0 %v580, 256
        %v583 = vpop.permute.xlu0 %582
        %v584 = vmul.f32 %v270, %v534
        %v585 = vmul.f32 %v271, %v541
        %v586 = vmul.f32 %v272, %v548
        %v587 = vmul.f32 %v273, %v555
        %v588 = vmul.f32 %v274, %v562
        %v589 = vmul.f32 %v275, %v569
        %v590 = vmul.f32 %v276, %v576
        %v591 = vmul.f32 %v277, %v583
        %592 = vst [vmem:[%s267] sm:$0xff] %v584
        %593 = vst [vmem:[%s267 + $0x8] sm:$0xff] %v585
        %594 = vst [vmem:[%s267 + $0x10] sm:$0xff] %v586
        %595 = vst [vmem:[%s267 + $0x18] sm:$0xff] %v587
        %596 = vst [vmem:[%s267 + $0x20] sm:$0xff] %v588
        %597 = vst [vmem:[%s267 + $0x28] sm:$0xff] %v589
        %598 = vst [vmem:[%s267 + $0x30] sm:$0xff] %v590
        %599 = vst [vmem:[%s267 + $0x38] sm:$0xff] %v591
        %s600 = sand.u32 %s141, 1
        %s601 = scalar_lea.sflag [#allocation4], %s600
        %s602 = sand.u32 %s141, 1
        %s603 = smul.addr %s602, 64
        %s604 = scalar_lea.vmem [#allocation8], %s603
        // Predicated region
        $region53: #{tpu_custom_call.1} parent=39 // pred_check
          %p605 = pneg %p151
        $region54: #{tpu_custom_call.1} parent=39 // pred_check_branch
          %607 = sbr.rel (%p605) target = $region56
        $region55: #{tpu_custom_call.1} parent=39 // pred_region
          %s608 = smul.u32 8, %s23
          %s610 = ssub.s32 1024, 1024
          %611 = vsyncadd %s601, %s610
          %s612 = smul.addr %s608, 128
          %s613 = scalar_lea.hbm %s5, %s612
          %s614 = sshll.u32 %s604, 4
          %s615 = int_to_ptr.vmem [resolvable:$true] %s614
          %620 = dma.vmem_to_hbm [thread:$0]  %s615, 1024, %s613, %s601, 128, 128, 8
        $region56: #{tpu_custom_call.1} parent=39 // pred_fallthru
          _
      $region40: #{tpu_custom_call.1} parent=5 // pred_fallthru
        _
      %p621 = scmp.le.s32.totalorder 2, %s18
      // Predicated region
      $region57: #{tpu_custom_call.1} parent=5 // pred_check
        %p622 = pneg %p621
      $region58: #{tpu_custom_call.1} parent=5 // pred_check_branch
        %624 = sbr.rel (%p622) target = $region60
      $region59: #{tpu_custom_call.1} parent=5 // pred_region
        %s625 = ssub.s32 %s18, 2
        // Predicated region
        $region61: #{tpu_custom_call.1} parent=59 // pred_check
          %p626 = pneg %p157
        $region62: #{tpu_custom_call.1} parent=59 // pred_check_branch
          %628 = sbr.rel (%p626) target = $region64
        $region63: #{tpu_custom_call.1} parent=59 // pred_region
          %s629 = sand.u32 %s142, 1
          %s630 = scalar_lea.sflag [#allocation4], %s629
          %s631 = sand.u32 %s142, 1
          %s632 = smul.addr %s631, 64
          %s633 = scalar_lea.vmem [#allocation8], %s632
          %634 = dma.done %s630, 1024
        $region64: #{tpu_custom_call.1} parent=59 // pred_fallthru
          _
      $region60: #{tpu_custom_call.1} parent=5 // pred_fallthru
        _
    $region6: #{tpu_custom_call.1} parent=1 // loop_footer
      %s22 = sadd.s32 1, %s18
    $region7: #{tpu_custom_call.1} parent=1 // loop_footer_branch
      %17 = sbr.rel target = $region3
    $region8: #{tpu_custom_call.1} parent=1 // loop_exit
      _
    %635 = vsyncpa [#allocation3], 1
    %s636 = scalar_lea.sflag [#allocation3], 1
    %637 = vsyncpa %s636, 1
    %638 = vsyncpa [#allocation6], 1
    %639 = vsyncpa [#allocation4], 1
    %s640 = scalar_lea.sflag [#allocation4], 1
    %641 = vsyncpa %s640, 1

</llo_original>
